<compile_context>
chip_gen: v7x
topology: tpu7x:2x2x1
jax: 0.10.0
libtpu: 0.0.40
codegen_flags: <defaults>
</compile_context>

<pallas_src>
import jax
import jax.numpy as jnp
from jax.experimental import pallas as pl
from jax.experimental.pallas import tpu as pltpu

# ----- hyper-parameters implied by Critic.__init__ ---------------------------
N_LAYERS = 4            # n_layers
IMG_DIM = 16            # img_dim  (const.n_bv_feat, small synthetic value)
D_OUT = 16              # transformer.d_out (synthetic)
COND_DIM = D_OUT + IMG_DIM
HIDDEN = 128            # hidden_dim (PyTorch default)
N_DR_FEAT = 8           # driver feature dim for the surrogate transformer

LANE = 128              # TPU lane width
TM_TARGET = 2048        # rows-per-tile target (rows live on the lane axis)


def _num_tensorcores():
    """TensorCores per chip: 2 on v7x, 1 on v5e/v6e (best-effort detection)."""
    try:
        kind = jax.devices()[0].device_kind.lower()
    except Exception:
        return 1
    return 2 if ("v7" in kind or "7x" in kind) else 1


def _choose_tile(n_rows, num_cores):
    """Pick a lane-aligned row tile.

    Single-TC chips (v5e/v6e): one tile as large as possible (grid is a serial
    loop there, extra steps only add overhead).  Dual-TC (v7x): aim for an
    even tile count, >= 4 when there is enough work, so both cores get work
    and per-core software pipelining.
    """
    lane_rows = pl.cdiv(n_rows, LANE) * LANE
    if num_cores <= 1 or lane_rows < 2 * LANE:
        tm = min(TM_TARGET, lane_rows)
        return max(LANE, (tm // LANE) * LANE)
    min_tiles = 4 if lane_rows >= 4 * LANE else 2
    tm = min(TM_TARGET, max(LANE, lane_rows // min_tiles))
    tm = max(LANE, (tm // LANE) * LANE)
    n_tiles = pl.cdiv(lane_rows, tm)
    if n_tiles > 1 and n_tiles % 2 == 1:
        # best-effort: shrink tm a little to balance the two TensorCores
        for cand in range(tm - LANE, max(LANE, tm - 4 * LANE) - 1, -LANE):
            if cand >= LANE and pl.cdiv(lane_rows, cand) % 2 == 0:
                tm = cand
                break
    return tm


# ----------------------------- Pallas kernel --------------------------------
def critic_mlp_kernel(est_ref, bv_ref, w_in_ref, b0_ref,
                      w_hid_ref, b_hid_ref, w_out_ref, b_out_ref,
                      o_ref, x_scr):
    # Fused torch.cat: copy the two bf16 input tiles into one (COND_DIM, TM)
    # VMEM scratch so the first layer is a single MXU dot with K=COND_DIM.
    x_scr[:D_OUT, :] = est_ref[...]
    x_scr[D_OUT:, :] = bv_ref[...]

    # First layer: Linear(cond_dim, hidden) + ReLU (bf16 MXU, f32 accumulate,
    # f32 bias/ReLU on the VPU).
    h = jnp.dot(w_in_ref[...], x_scr[...], preferred_element_type=jnp.float32)
    h = jnp.maximum(h + b0_ref[...], 0.0)

    # (n_layers - 1) x [Linear(hidden, hidden) + ReLU], statically unrolled.
    # Activations are cast to bf16 only immediately before each dot.
    for i in range(N_LAYERS - 1):
        h = jnp.dot(w_hid_ref[i], h.astype(jnp.bfloat16),
                    preferred_element_type=jnp.float32)
        h = jnp.maximum(h + b_hid_ref[i], 0.0)

    # Final Linear(hidden, 1): f32 VPU multiply + explicit pairwise add tree
    # (keeps the N=1 dot off the MXU and the reduction off the XLU), producing
    # a lane-dense (1, TM) row.  Scalar bias comes from SMEM.
    r = h * w_out_ref[...]                       # (HIDDEN, TM) f32
    s = HIDDEN
    while s > 8:
        s //= 2
        r = r[:s] + r[s:]
    o_ref[...] = jnp.sum(r, axis=0, keepdims=True) + b_out_ref[0, 0]


def critic_mlp(est_t, bv_t, params):
    """est_t: (D_OUT, N*A), bv_t: (IMG_DIM, N*A)  ->  (N*A, 1) predictions."""
    n_rows = est_t.shape[1]
    est_t = est_t.astype(jnp.bfloat16)
    bv_t = bv_t.astype(jnp.bfloat16)

    tm = _choose_tile(n_rows, _num_tensorcores())
    n_pad = pl.cdiv(n_rows, tm) * tm
    if n_pad != n_rows:
        # Tail-only pad (skipped entirely when n_rows is a tile multiple);
        # padded columns are per-row independent garbage sliced off below.
        est_t = jnp.pad(est_t, ((0, 0), (0, n_pad - n_rows)))
        bv_t = jnp.pad(bv_t, ((0, 0), (0, n_pad - n_rows)))

    grid = (n_pad // tm,)
    out = pl.pallas_call(
        critic_mlp_kernel,
        out_shape=jax.ShapeDtypeStruct((1, n_pad), jnp.float32),
        grid_spec=pltpu.PrefetchScalarGridSpec(
            num_scalar_prefetch=0,
            grid=grid,
            in_specs=[
                pl.BlockSpec((D_OUT, tm), lambda i: (0, i)),        # est tile
                pl.BlockSpec((IMG_DIM, tm), lambda i: (0, i)),      # bv tile
                pl.BlockSpec((HIDDEN, COND_DIM), lambda i: (0, 0)),  # w_in (bf16)
                pl.BlockSpec((HIDDEN, 1), lambda i: (0, 0)),        # b_in column
                pl.BlockSpec((N_LAYERS - 1, HIDDEN, HIDDEN),
                             lambda i: (0, 0, 0)),                  # hidden weights
                pl.BlockSpec((N_LAYERS - 1, HIDDEN, 1),
                             lambda i: (0, 0, 0)),                  # hidden biases
                pl.BlockSpec((HIDDEN, 1), lambda i: (0, 0)),        # w_out column
                pl.BlockSpec(memory_space=pltpu.MemorySpace.SMEM),  # b_out scalar
            ],
            out_specs=pl.BlockSpec((1, tm), lambda i: (0, i)),
            scratch_shapes=[pltpu.VMEM((COND_DIM, tm), jnp.bfloat16)],
        ),
        compiler_params=pltpu.CompilerParams(
            dimension_semantics=("parallel",)),
    )(est_t, bv_t, params["w_in"], params["b0"],
      params["w_hid"], params["b_hid"], params["w_out"], params["b_out"])
    # (1, n_pad) -> (n_rows, 1): free layout plumbing in the wrapper.
    return out.reshape(-1, 1)[:n_rows]


# ---------------------------- parameter init --------------------------------
def xavier_uniform(key, shape):
    fan_out, fan_in = shape[-2], shape[-1]
    bound = (6.0 / (fan_in + fan_out)) ** 0.5
    return jax.random.uniform(key, shape, jnp.float32, -bound, bound)


def init_params(key):
    ks = jax.random.split(key, 9)
    params = {
        # surrogate transformer weights (plain-JAX glue)
        "w_dr": xavier_uniform(ks[0], (N_DR_FEAT, D_OUT)),
        "w_bv": xavier_uniform(ks[1], (IMG_DIM, D_OUT)),
        # critic MLP: MXU weights stored bf16, (out, in) layout; the first
        # layer weight is pre-concatenated (fused torch.cat).  Biases and the
        # final VPU weight stay f32.
        "w_in": xavier_uniform(ks[2], (HIDDEN, COND_DIM)).astype(jnp.bfloat16),
        "b0": jax.random.uniform(ks[3], (HIDDEN, 1), jnp.float32, -0.05, 0.05),
        "w_hid": xavier_uniform(ks[4], (N_LAYERS - 1, HIDDEN, HIDDEN)
                                ).astype(jnp.bfloat16),
        "b_hid": jax.random.uniform(ks[5], (N_LAYERS - 1, HIDDEN, 1),
                                    jnp.float32, -0.05, 0.05),
        "w_out": xavier_uniform(ks[6], (HIDDEN, 1)),
        "b_out": jax.random.uniform(ks[7], (1, 1), jnp.float32, -0.05, 0.05),
    }
    return params


# --------------------------- forward (glue + kernel) -------------------------
def transformer_surrogate(driver_src, real, src_key_mask, w_dr, w_bv):
    # TODO(synk): the real transformer nn.Module is injected at construction
    # time and its definition is not part of the provided source; this is a
    # deterministic linear surrogate emitting est_real directly in the
    # transposed (d_out, n_batch*n_alt) layout the Pallas kernel consumes.
    dr = jnp.tanh(driver_src @ w_dr)                        # (N, D_OUT)
    bv = jnp.tanh(jnp.einsum('naf,fd->dna', real, w_bv))    # (D_OUT, N, A)
    est = bv + dr.T[:, :, None]
    est = jnp.where(src_key_mask[None, :, :], 0.0, est)
    return est.reshape(D_OUT, -1)                           # (D_OUT, N*A)


def critic_forward(params, bv_features, driver_src, real, src_key_mask=None):
    n_batch, max_alt, _ = bv_features.shape
    if src_key_mask is None:
        src_key_mask = jnp.zeros((n_batch, max_alt), dtype=bool)
    # est comes out of its producer already transposed; bv needs one transpose.
    est_t = transformer_surrogate(driver_src, real, src_key_mask,
                                  params["w_dr"], params["w_bv"])
    bv_t = bv_features.reshape(n_batch * max_alt, IMG_DIM).T
    # torch.cat is fused inside the kernel, so no (n_rows, cond_dim) concat
    # slab is materialized in HBM.
    pred = critic_mlp(est_t, bv_t, params)
    return pred                                             # (N*A, 1)


def critic_mlp_ref(cond_feat, params):
    """Plain-JAX reference emulating the kernel's bf16-operand / f32 math."""
    def bf16(x):
        return x.astype(jnp.bfloat16).astype(jnp.float32)
    w_in = params["w_in"].astype(jnp.float32)
    h = jnp.maximum(bf16(cond_feat) @ w_in.T + params["b0"][:, 0], 0.0)
    for i in range(N_LAYERS - 1):
        w = params["w_hid"][i].astype(jnp.float32)
        h = jnp.maximum(bf16(h) @ w.T + params["b_hid"][i][:, 0], 0.0)
    # final layer in pure f32 elementwise math (matches the kernel's VPU path)
    return ((h * params["w_out"][:, 0]).sum(axis=1, keepdims=True)
            + params["b_out"][0, 0])


# --------------------------------- main --------------------------------------
if __name__ == "__main__":
    key = jax.random.PRNGKey(0)
    k_par, k_bv, k_dr, k_real = jax.random.split(key, 4)

    n_batch, max_alt = 2, 8
    params = init_params(k_par)

    bv_features = jax.random.normal(k_bv, (n_batch, max_alt, IMG_DIM), jnp.float32)
    driver_src = jax.random.normal(k_dr, (n_batch, N_DR_FEAT), jnp.float32)
    real = jax.random.normal(k_real, (n_batch, max_alt, IMG_DIM), jnp.float32)

    pred = critic_forward(params, bv_features, driver_src, real)
    pred = jax.block_until_ready(pred)
    assert pred.shape == (n_batch * max_alt, 1)

    # verify kernel against plain-JAX reference of the MLP
    src_key_mask = jnp.zeros((n_batch, max_alt), dtype=bool)
    est_t = transformer_surrogate(driver_src, real, src_key_mask,
                                  params["w_dr"], params["w_bv"])
    cond_feat = jnp.concatenate(
        [est_t.T, bv_features.reshape(n_batch * max_alt, IMG_DIM)], axis=1)
    ref = critic_mlp_ref(cond_feat, params)
    assert jnp.allclose(pred, ref, atol=1e-3, rtol=1e-3)

    print("KERNEL_OK")
</pallas_src>

<mosaic_0001>
module attributes {stable_mosaic.version = 11 : i64} {
  func.func @critic_mlp_kernel(%arg0: i32, %arg1: memref<16x128xbf16, #tpu.memory_space<vmem>>, %arg2: memref<16x128xbf16, #tpu.memory_space<vmem>>, %arg3: memref<128x32xbf16, #tpu.memory_space<vmem>>, %arg4: memref<128x1xf32, #tpu.memory_space<vmem>>, %arg5: memref<3x128x128xbf16, #tpu.memory_space<vmem>>, %arg6: memref<3x128x1xf32, #tpu.memory_space<vmem>>, %arg7: memref<128x1xf32, #tpu.memory_space<vmem>>, %arg8: memref<1x1xf32, #tpu.memory_space<smem>>, %arg9: memref<1x128xf32, #tpu.memory_space<vmem>>, %arg10: memref<32x128xbf16, #tpu.memory_space<vmem>>) attributes {dimension_semantics = [#tpu.dimension_semantics<parallel>], iteration_bounds = array<i64: 1>, scalar_prefetch = 0 : i64, scratch_operands = 1 : i64, tpu.core_type = #tpu.core_type<tc>, window_params = [{transform_indices = @transform_0, window_bounds = array<i64: 16, 128>}, {transform_indices = @transform_1, window_bounds = array<i64: 16, 128>}, {pipeline_mode = #tpu.pipeline_mode<synchronous>, transform_indices = @transform_2, window_bounds = array<i64: 128, 32>}, {pipeline_mode = #tpu.pipeline_mode<synchronous>, transform_indices = @transform_3, window_bounds = array<i64: 128, 1>}, {pipeline_mode = #tpu.pipeline_mode<synchronous>, transform_indices = @transform_4, window_bounds = array<i64: 3, 128, 128>}, {pipeline_mode = #tpu.pipeline_mode<synchronous>, transform_indices = @transform_5, window_bounds = array<i64: 3, 128, 1>}, {pipeline_mode = #tpu.pipeline_mode<synchronous>, transform_indices = @transform_6, window_bounds = array<i64: 128, 1>}, {transform_indices = @transform_7, window_bounds = array<i64: 1, 1>}, {transform_indices = @transform_8, window_bounds = array<i64: 1, 128>}]} {
    %c0 = arith.constant 0 : index
    %c0_0 = arith.constant 0 : index
    %0 = vector.load %arg1[%c0, %c0_0] : memref<16x128xbf16, #tpu.memory_space<vmem>>, vector<16x128xbf16>
    %c0_1 = arith.constant 0 : index
    %c0_2 = arith.constant 0 : index
    %1 = vector.load %arg10[%c0_1, %c0_2] : memref<32x128xbf16, #tpu.memory_space<vmem>>, vector<16x128xbf16>
    tpu.vector_store %arg10[%c0_1, %c0_2], %0 {strides = array<i32>} : memref<32x128xbf16, #tpu.memory_space<vmem>>, vector<16x128xbf16>,
    %c0_3 = arith.constant 0 : index
    %c0_4 = arith.constant 0 : index
    %2 = vector.load %arg2[%c0_3, %c0_4] : memref<16x128xbf16, #tpu.memory_space<vmem>>, vector<16x128xbf16>
    %c16 = arith.constant 16 : index
    %c0_5 = arith.constant 0 : index
    %3 = vector.load %arg10[%c16, %c0_5] : memref<32x128xbf16, #tpu.memory_space<vmem>>, vector<16x128xbf16>
    tpu.vector_store %arg10[%c16, %c0_5], %2 {strides = array<i32>} : memref<32x128xbf16, #tpu.memory_space<vmem>>, vector<16x128xbf16>,
    %c0_6 = arith.constant 0 : index
    %c0_7 = arith.constant 0 : index
    %4 = vector.load %arg3[%c0_6, %c0_7] : memref<128x32xbf16, #tpu.memory_space<vmem>>, vector<128x32xbf16>
    %c0_8 = arith.constant 0 : index
    %c0_9 = arith.constant 0 : index
    %5 = vector.load %arg10[%c0_8, %c0_9] : memref<32x128xbf16, #tpu.memory_space<vmem>>, vector<32x128xbf16>
    %cst = arith.constant dense<0.000000e+00> : vector<128x128xf32>
    %6 = tpu.matmul %4, %5, %cst {dimension_numbers = #tpu.dot_dimension_numbers<[1], [0], [0], [1], [0, 0, 1, 1], [], []>} : vector<128x32xbf16>, vector<32x128xbf16>, vector<128x128xf32> -> vector<128x128xf32>
    %c0_10 = arith.constant 0 : index
    %c0_11 = arith.constant 0 : index
    %7 = vector.load %arg4[%c0_10, %c0_11] : memref<128x1xf32, #tpu.memory_space<vmem>>, vector<128x1xf32>
    %8 = vector.broadcast %7 : vector<128x1xf32> to vector<128x128xf32>
    %9 = arith.addf %6, %8 : vector<128x128xf32>
    %cst_12 = arith.constant 0.000000e+00 : f32
    %10 = vector.broadcast %cst_12 : f32 to vector<128x128xf32>
    %11 = arith.maximumf %9, %10 : vector<128x128xf32>
    %c0_13 = arith.constant 0 : index
    %c0_14 = arith.constant 0 : index
    %c0_15 = arith.constant 0 : index
    %12 = vector.load %arg5[%c0_13, %c0_14, %c0_15] : memref<3x128x128xbf16, #tpu.memory_space<vmem>>, vector<1x128x128xbf16>
    %13 = vector.shape_cast %12 : vector<1x128x128xbf16> to vector<128x128xbf16>
    %14 = arith.truncf %11 : vector<128x128xf32> to vector<128x128xbf16>
    %cst_16 = arith.constant dense<0.000000e+00> : vector<128x128xf32>
    %15 = tpu.matmul %13, %14, %cst_16 {dimension_numbers = #tpu.dot_dimension_numbers<[1], [0], [0], [1], [0, 0, 1, 1], [], []>} : vector<128x128xbf16>, vector<128x128xbf16>, vector<128x128xf32> -> vector<128x128xf32>
    %c0_17 = arith.constant 0 : index
    %c0_18 = arith.constant 0 : index
    %c0_19 = arith.constant 0 : index
    %16 = vector.load %arg6[%c0_17, %c0_18, %c0_19] : memref<3x128x1xf32, #tpu.memory_space<vmem>>, vector<1x128x1xf32>
    %17 = vector.shape_cast %16 : vector<1x128x1xf32> to vector<128x1xf32>
    %18 = vector.broadcast %17 : vector<128x1xf32> to vector<128x128xf32>
    %19 = arith.addf %15, %18 : vector<128x128xf32>
    %cst_20 = arith.constant 0.000000e+00 : f32
    %20 = vector.broadcast %cst_20 : f32 to vector<128x128xf32>
    %21 = arith.maximumf %19, %20 : vector<128x128xf32>
    %c1 = arith.constant 1 : index
    %c0_21 = arith.constant 0 : index
    %c0_22 = arith.constant 0 : index
    %22 = vector.load %arg5[%c1, %c0_21, %c0_22] : memref<3x128x128xbf16, #tpu.memory_space<vmem>>, vector<1x128x128xbf16>
    %23 = vector.shape_cast %22 : vector<1x128x128xbf16> to vector<128x128xbf16>
    %24 = arith.truncf %21 : vector<128x128xf32> to vector<128x128xbf16>
    %cst_23 = arith.constant dense<0.000000e+00> : vector<128x128xf32>
    %25 = tpu.matmul %23, %24, %cst_23 {dimension_numbers = #tpu.dot_dimension_numbers<[1], [0], [0], [1], [0, 0, 1, 1], [], []>} : vector<128x128xbf16>, vector<128x128xbf16>, vector<128x128xf32> -> vector<128x128xf32>
    %c1_24 = arith.constant 1 : index
    %c0_25 = arith.constant 0 : index
    %c0_26 = arith.constant 0 : index
    %26 = vector.load %arg6[%c1_24, %c0_25, %c0_26] : memref<3x128x1xf32, #tpu.memory_space<vmem>>, vector<1x128x1xf32>
    %27 = vector.shape_cast %26 : vector<1x128x1xf32> to vector<128x1xf32>
    %28 = vector.broadcast %27 : vector<128x1xf32> to vector<128x128xf32>
    %29 = arith.addf %25, %28 : vector<128x128xf32>
    %cst_27 = arith.constant 0.000000e+00 : f32
    %30 = vector.broadcast %cst_27 : f32 to vector<128x128xf32>
    %31 = arith.maximumf %29, %30 : vector<128x128xf32>
    %c2 = arith.constant 2 : index
    %c0_28 = arith.constant 0 : index
    %c0_29 = arith.constant 0 : index
    %32 = vector.load %arg5[%c2, %c0_28, %c0_29] : memref<3x128x128xbf16, #tpu.memory_space<vmem>>, vector<1x128x128xbf16>
    %33 = vector.shape_cast %32 : vector<1x128x128xbf16> to vector<128x128xbf16>
    %34 = arith.truncf %31 : vector<128x128xf32> to vector<128x128xbf16>
    %cst_30 = arith.constant dense<0.000000e+00> : vector<128x128xf32>
    %35 = tpu.matmul %33, %34, %cst_30 {dimension_numbers = #tpu.dot_dimension_numbers<[1], [0], [0], [1], [0, 0, 1, 1], [], []>} : vector<128x128xbf16>, vector<128x128xbf16>, vector<128x128xf32> -> vector<128x128xf32>
    %c2_31 = arith.constant 2 : index
    %c0_32 = arith.constant 0 : index
    %c0_33 = arith.constant 0 : index
    %36 = vector.load %arg6[%c2_31, %c0_32, %c0_33] : memref<3x128x1xf32, #tpu.memory_space<vmem>>, vector<1x128x1xf32>
    %37 = vector.shape_cast %36 : vector<1x128x1xf32> to vector<128x1xf32>
    %38 = vector.broadcast %37 : vector<128x1xf32> to vector<128x128xf32>
    %39 = arith.addf %35, %38 : vector<128x128xf32>
    %cst_34 = arith.constant 0.000000e+00 : f32
    %40 = vector.broadcast %cst_34 : f32 to vector<128x128xf32>
    %41 = arith.maximumf %39, %40 : vector<128x128xf32>
    %c0_35 = arith.constant 0 : index
    %c0_36 = arith.constant 0 : index
    %42 = vector.load %arg7[%c0_35, %c0_36] : memref<128x1xf32, #tpu.memory_space<vmem>>, vector<128x1xf32>
    %43 = vector.broadcast %42 : vector<128x1xf32> to vector<128x128xf32>
    %44 = arith.mulf %41, %43 : vector<128x128xf32>
    %45 = vector.extract_strided_slice %44 {offsets = [0, 0], sizes = [64, 128], strides = [1, 1]} : vector<128x128xf32> to vector<64x128xf32>
    %46 = vector.extract_strided_slice %44 {offsets = [64, 0], sizes = [64, 128], strides = [1, 1]} : vector<128x128xf32> to vector<64x128xf32>
    %47 = arith.addf %45, %46 : vector<64x128xf32>
    %48 = vector.extract_strided_slice %47 {offsets = [0, 0], sizes = [32, 128], strides = [1, 1]} : vector<64x128xf32> to vector<32x128xf32>
    %49 = vector.extract_strided_slice %47 {offsets = [32, 0], sizes = [32, 128], strides = [1, 1]} : vector<64x128xf32> to vector<32x128xf32>
    %50 = arith.addf %48, %49 : vector<32x128xf32>
    %51 = vector.extract_strided_slice %50 {offsets = [0, 0], sizes = [16, 128], strides = [1, 1]} : vector<32x128xf32> to vector<16x128xf32>
    %52 = vector.extract_strided_slice %50 {offsets = [16, 0], sizes = [16, 128], strides = [1, 1]} : vector<32x128xf32> to vector<16x128xf32>
    %53 = arith.addf %51, %52 : vector<16x128xf32>
    %54 = vector.extract_strided_slice %53 {offsets = [0, 0], sizes = [8, 128], strides = [1, 1]} : vector<16x128xf32> to vector<8x128xf32>
    %55 = vector.extract_strided_slice %53 {offsets = [8, 0], sizes = [8, 128], strides = [1, 1]} : vector<16x128xf32> to vector<8x128xf32>
    %56 = arith.addf %54, %55 : vector<8x128xf32>
    %cst_37 = arith.constant dense<0.000000e+00> : vector<128xf32>
    %57 = vector.multi_reduction <add>, %56, %cst_37 [0] : vector<8x128xf32> to vector<128xf32>
    %58 = vector.shape_cast %57 : vector<128xf32> to vector<1x128xf32>
    %c0_38 = arith.constant 0 : index
    %c0_39 = arith.constant 0 : index
    %59 = memref.load %arg8[%c0_38, %c0_39] : memref<1x1xf32, #tpu.memory_space<smem>>
    %60 = vector.broadcast %59 : f32 to vector<1x128xf32>
    %61 = arith.addf %58, %60 : vector<1x128xf32>
    %c0_40 = arith.constant 0 : index
    %c0_41 = arith.constant 0 : index
    %62 = vector.load %arg9[%c0_40, %c0_41] : memref<1x128xf32, #tpu.memory_space<vmem>>, vector<1x128xf32>
    tpu.vector_store %arg9[%c0_40, %c0_41], %61 {strides = array<i32>} : memref<1x128xf32, #tpu.memory_space<vmem>>, vector<1x128xf32>,
    return
  }
  func.func @transform_0(%arg0: i32) -> (i32, i32) {
    %c0_i32 = arith.constant 0 : i32
    %c0_i32_0 = arith.constant 0 : i32
    return %c0_i32, %arg0 : i32, i32
  }
  func.func @transform_1(%arg0: i32) -> (i32, i32) {
    %c0_i32 = arith.constant 0 : i32
    %c0_i32_0 = arith.constant 0 : i32
    return %c0_i32, %arg0 : i32, i32
  }
  func.func @transform_2(%arg0: i32) -> (i32, i32) {
    %c0_i32 = arith.constant 0 : i32
    %c0_i32_0 = arith.constant 0 : i32
    %c0_i32_1 = arith.constant 0 : i32
    return %c0_i32, %c0_i32_0 : i32, i32
  }
  func.func @transform_3(%arg0: i32) -> (i32, i32) {
    %c0_i32 = arith.constant 0 : i32
    %c0_i32_0 = arith.constant 0 : i32
    %c0_i32_1 = arith.constant 0 : i32
    return %c0_i32, %c0_i32_0 : i32, i32
  }
  func.func @transform_4(%arg0: i32) -> (i32, i32, i32) {
    %c0_i32 = arith.constant 0 : i32
    %c0_i32_0 = arith.constant 0 : i32
    %c0_i32_1 = arith.constant 0 : i32
    %c0_i32_2 = arith.constant 0 : i32
    return %c0_i32, %c0_i32_0, %c0_i32_1 : i32, i32, i32
  }
  func.func @transform_5(%arg0: i32) -> (i32, i32, i32) {
    %c0_i32 = arith.constant 0 : i32
    %c0_i32_0 = arith.constant 0 : i32
    %c0_i32_1 = arith.constant 0 : i32
    %c0_i32_2 = arith.constant 0 : i32
    return %c0_i32, %c0_i32_0, %c0_i32_1 : i32, i32, i32
  }
  func.func @transform_6(%arg0: i32) -> (i32, i32) {
    %c0_i32 = arith.constant 0 : i32
    %c0_i32_0 = arith.constant 0 : i32
    %c0_i32_1 = arith.constant 0 : i32
    return %c0_i32, %c0_i32_0 : i32, i32
  }
  func.func @transform_7(%arg0: i32) -> (i32, i32) {
    %c0_i32 = arith.constant 0 : i32
    %c0_i32_0 = arith.constant 0 : i32
    %c0_i32_1 = arith.constant 0 : i32
    return %c0_i32, %c0_i32_0 : i32, i32
  }
  func.func @transform_8(%arg0: i32) -> (i32, i32) {
    %c0_i32 = arith.constant 0 : i32
    %c0_i32_0 = arith.constant 0 : i32
    return %c0_i32, %arg0 : i32, i32
  }
}

</mosaic_0001>

<llo_original>
// kernel: tpu_custom_call.1
$region0: #{tpu_custom_call.1}
  #allocation0 [shape = 'u32[]', space=smem, size = 0x4, offset = 0x4, fixed_abs, tag = 'smem constant byte address 0x4 - core index']
  #allocation1 [shape = 'u32[144,128]{1,0:T(1,128)}', space=vmem, size = 0x12000, scoped, tag = 'internal scratch']
  #allocation2 [shape = 'bf16[32,128]{1,0:T(16,128)(2,1)}', space=vmem, size = 0x2000, scoped, tag = 'scratch operand']
  #allocation3 [shape = 'f32[1,1]{1,0:T(1,128)S(6)}', space=smem, size = 0x200, scoped, tag = 'scoped memory for tpu_custom_call.1']
  %s0 = inlined_call_operand.vmem [shape: bf16[16,128], index: 0, kind: input, shape index: {}]
  %s1 = inlined_call_operand.vmem [shape: bf16[16,128], index: 1, kind: input, shape index: {}]
  %s2 = inlined_call_operand.vmem [shape: bf16[128,32], index: 2, kind: input, shape index: {}]
  %s3 = inlined_call_operand.vmem [shape: f32[128,1], index: 3, kind: input, shape index: {}]
  %s4 = inlined_call_operand.vmem [shape: bf16[3,128,128], index: 4, kind: input, shape index: {}]
  %s5 = inlined_call_operand.vmem [shape: f32[3,128,1], index: 5, kind: input, shape index: {}]
  %s6 = inlined_call_operand.vmem [shape: f32[128,1], index: 6, kind: input, shape index: {}]
  %s7 = inlined_call_operand.<no memory space> [shape: f32[1,1], index: 7, kind: input, shape index: {}]
  %s8 = inlined_call_operand.hbm [shape: f32[1,128], index: 8, kind: output, shape index: {}]
  %s9 = sld [smem:[#allocation0]]
  $region42: #{tpu_custom_call.1} parent=0
    _
  %s11 = ssub.s32 1, %s9
  %s12 = scalar_select 0, %s11, %s9
  %13 = sst [smem:[#allocation3]] %s7
  $region1: #{tpu_custom_call.1} parent=0
    #allocation4 [shape = 'u8[512]{0}', space=vmem, size = 0x400, scoped, tag = 'output window, operand 0, single buffered']
    #allocation5 [shape = 's32[1]{0}', space=sflag, size = 0x4, scoped, tag = 'scoped memory for tpu_custom_call.1']
    %14 = vsyncpa [#allocation5], 0
    // Predicated region
    $region2: #{tpu_custom_call.1} parent=1 // pred_check
      _
    $region3: #{tpu_custom_call.1} parent=1 // pred_check_branch
      %16 = sbr.rel (0) target = $region5
    $region4: #{tpu_custom_call.1} parent=1 // pred_region
      _
    $region5: #{tpu_custom_call.1} parent=1 // pred_fallthru
      _
    // Predicated region
    $region6: #{tpu_custom_call.1} parent=1 // pred_check
      _
    $region7: #{tpu_custom_call.1} parent=1 // pred_check_branch
      %18 = sbr.rel (0) target = $region9
    $region8: #{tpu_custom_call.1} parent=1 // pred_region
      _
    $region9: #{tpu_custom_call.1} parent=1 // pred_fallthru
      _
    // Predicated region
    $region10: #{tpu_custom_call.1} parent=1 // pred_check
      _
    $region11: #{tpu_custom_call.1} parent=1 // pred_check_branch
      %20 = sbr.rel (0) target = $region13
    $region12: #{tpu_custom_call.1} parent=1 // pred_region
      _
    $region13: #{tpu_custom_call.1} parent=1 // pred_fallthru
      _
    // Predicated region
    $region14: #{tpu_custom_call.1} parent=1 // pred_check
      _
    $region15: #{tpu_custom_call.1} parent=1 // pred_check_branch
      %22 = sbr.rel (0) target = $region17
    $region16: #{tpu_custom_call.1} parent=1 // pred_region
      _
    $region17: #{tpu_custom_call.1} parent=1 // pred_fallthru
      _
    // Predicated region
    $region18: #{tpu_custom_call.1} parent=1 // pred_check
      _
    $region19: #{tpu_custom_call.1} parent=1 // pred_check_branch
      %24 = sbr.rel (0) target = $region21
    $region20: #{tpu_custom_call.1} parent=1 // pred_region
      _
    $region21: #{tpu_custom_call.1} parent=1 // pred_fallthru
      _
    // Predicated region
    $region22: #{tpu_custom_call.1} parent=1 // pred_check
      _
    $region23: #{tpu_custom_call.1} parent=1 // pred_check_branch
      %26 = sbr.rel (0) target = $region25
    $region24: #{tpu_custom_call.1} parent=1 // pred_region
      _
    $region25: #{tpu_custom_call.1} parent=1 // pred_fallthru
      _
    // Predicated region
    $region26: #{tpu_custom_call.1} parent=1 // pred_check
      _
    $region27: #{tpu_custom_call.1} parent=1 // pred_check_branch
      %28 = sbr.rel (0) target = $region29
    $region28: #{tpu_custom_call.1} parent=1 // pred_region
      _
    $region29: #{tpu_custom_call.1} parent=1 // pred_fallthru
      _
    // Predicated region
    $region30: #{tpu_custom_call.1} parent=1 // pred_check
      _
    $region31: #{tpu_custom_call.1} parent=1 // pred_check_branch
      %30 = sbr.rel (0) target = $region33
    $region32: #{tpu_custom_call.1} parent=1 // pred_region
      _
    $region33: #{tpu_custom_call.1} parent=1 // pred_fallthru
      _
    %v32 = vld [vmem:[%s0] sm:$0xf]
    %v33 = vld [vmem:[%s0 + $0x4] sm:$0xf]
    %v36 = vunpack.c.l.b16 %v32
    %v37 = vunpack.c.l.b16 %v33
    %v38 = vpack.c.b16 %v37, %v36
    %40 = vst [vmem:[#allocation2] sm:$0xff] %v38
    %v41 = vld [vmem:[%s1] sm:$0xf]
    %v42 = vld [vmem:[%s1 + $0x4] sm:$0xf]
    %v45 = vunpack.c.l.b16 %v41
    %v46 = vunpack.c.l.b16 %v42
    %v47 = vpack.c.b16 %v46, %v45
    %49 = vst [vmem:[#allocation2 + $0x8] sm:$0xff] %v47
    %v50 = vld [vmem:[%s2] sm:$0xf]
    %v51 = vld [vmem:[%s2 + $0x4] sm:$0xf]
    %v52 = vld [vmem:[%s2 + $0x8] sm:$0xf]
    %v53 = vld [vmem:[%s2 + $0xc] sm:$0xf]
    %v54 = vld [vmem:[%s2 + $0x10] sm:$0xf]
    %v55 = vld [vmem:[%s2 + $0x14] sm:$0xf]
    %v56 = vld [vmem:[%s2 + $0x18] sm:$0xf]
    %v57 = vld [vmem:[%s2 + $0x1c] sm:$0xf]
    %v58 = vld [vmem:[%s2 + $0x20] sm:$0xf]
    %v59 = vld [vmem:[%s2 + $0x24] sm:$0xf]
    %v60 = vld [vmem:[%s2 + $0x28] sm:$0xf]
    %v61 = vld [vmem:[%s2 + $0x2c] sm:$0xf]
    %v62 = vld [vmem:[%s2 + $0x30] sm:$0xf]
    %v63 = vld [vmem:[%s2 + $0x34] sm:$0xf]
    %v64 = vld [vmem:[%s2 + $0x38] sm:$0xf]
    %v65 = vld [vmem:[%s2 + $0x3c] sm:$0xf]
    %v66 = vld [vmem:[#allocation2] sm:$0xff]
    %v67 = vld [vmem:[#allocation2 + $0x8] sm:$0xff]
    %v68 = vld [vmem:[%s3] sm:$0xff]
    %v69 = vld [vmem:[%s3 + $0x8] sm:$0xff]
    %v70 = vld [vmem:[%s3 + $0x10] sm:$0xff]
    %v71 = vld [vmem:[%s3 + $0x18] sm:$0xff]
    %v72 = vld [vmem:[%s3 + $0x20] sm:$0xff]
    %v73 = vld [vmem:[%s3 + $0x28] sm:$0xff]
    %v74 = vld [vmem:[%s3 + $0x30] sm:$0xff]
    %v75 = vld [vmem:[%s3 + $0x38] sm:$0xff]
    %v76 = vld [vmem:[%s3 + $0x40] sm:$0xff]
    %v77 = vld [vmem:[%s3 + $0x48] sm:$0xff]
    %v78 = vld [vmem:[%s3 + $0x50] sm:$0xff]
    %v79 = vld [vmem:[%s3 + $0x58] sm:$0xff]
    %v80 = vld [vmem:[%s3 + $0x60] sm:$0xff]
    %v81 = vld [vmem:[%s3 + $0x68] sm:$0xff]
    %v82 = vld [vmem:[%s3 + $0x70] sm:$0xff]
    %v83 = vld [vmem:[%s3 + $0x78] sm:$0xff]
    %85 = vset.pattern.permute.xlu0 0
    %86 = vperm.xlu0 %85, %v68
    %v87 = vpop.permute.xlu0 %86
    %90 = vset.pattern.permute.xlu0 0
    %91 = vperm.xlu0 %90, %v69
    %v92 = vpop.permute.xlu0 %91
    %95 = vset.pattern.permute.xlu0 0
    %96 = vperm.xlu0 %95, %v70
    %v97 = vpop.permute.xlu0 %96
    %100 = vset.pattern.permute.xlu0 0
    %101 = vperm.xlu0 %100, %v71
    %v102 = vpop.permute.xlu0 %101
    %105 = vset.pattern.permute.xlu0 0
    %106 = vperm.xlu0 %105, %v72
    %v107 = vpop.permute.xlu0 %106
    %110 = vset.pattern.permute.xlu0 0
    %111 = vperm.xlu0 %110, %v73
    %v112 = vpop.permute.xlu0 %111
    %115 = vset.pattern.permute.xlu0 0
    %116 = vperm.xlu0 %115, %v74
    %v117 = vpop.permute.xlu0 %116
    %120 = vset.pattern.permute.xlu0 0
    %121 = vperm.xlu0 %120, %v75
    %v122 = vpop.permute.xlu0 %121
    %125 = vset.pattern.permute.xlu0 0
    %126 = vperm.xlu0 %125, %v76
    %v127 = vpop.permute.xlu0 %126
    %130 = vset.pattern.permute.xlu0 0
    %131 = vperm.xlu0 %130, %v77
    %v132 = vpop.permute.xlu0 %131
    %135 = vset.pattern.permute.xlu0 0
    %136 = vperm.xlu0 %135, %v78
    %v137 = vpop.permute.xlu0 %136
    %140 = vset.pattern.permute.xlu0 0
    %141 = vperm.xlu0 %140, %v79
    %v142 = vpop.permute.xlu0 %141
    %145 = vset.pattern.permute.xlu0 0
    %146 = vperm.xlu0 %145, %v80
    %v147 = vpop.permute.xlu0 %146
    %150 = vset.pattern.permute.xlu0 0
    %151 = vperm.xlu0 %150, %v81
    %v152 = vpop.permute.xlu0 %151
    %155 = vset.pattern.permute.xlu0 0
    %156 = vperm.xlu0 %155, %v82
    %v157 = vpop.permute.xlu0 %156
    %160 = vset.pattern.permute.xlu0 0
    %161 = vperm.xlu0 %160, %v83
    %v162 = vpop.permute.xlu0 %161
    %v180 = vunpack.c.l.b16 %v50
    %v181 = vunpack.c.l.b16 %v51
    %v182 = vunpack.c.l.b16 %v52
    %v183 = vunpack.c.l.b16 %v53
    %v184 = vunpack.c.l.b16 %v54
    %v185 = vunpack.c.l.b16 %v55
    %v186 = vunpack.c.l.b16 %v56
    %v187 = vunpack.c.l.b16 %v57
    %v188 = vunpack.c.l.b16 %v58
    %v189 = vunpack.c.l.b16 %v59
    %v190 = vunpack.c.l.b16 %v60
    %v191 = vunpack.c.l.b16 %v61
    %v192 = vunpack.c.l.b16 %v62
    %v193 = vunpack.c.l.b16 %v63
    %v194 = vunpack.c.l.b16 %v64
    %v195 = vunpack.c.l.b16 %v65
    %v196 = vpack.c.b16 %v181, %v180
    %v197 = vpack.c.b16 %v183, %v182
    %v198 = vpack.c.b16 %v185, %v184
    %v199 = vpack.c.b16 %v187, %v186
    %v200 = vpack.c.b16 %v189, %v188
    %v201 = vpack.c.b16 %v191, %v190
    %v202 = vpack.c.b16 %v193, %v192
    %v203 = vpack.c.b16 %v195, %v194
    %vm204 = vcmask 261120
    %v206 = vsel %vm204, %v196, 0
    %v209 = vsel %vm204, %v197, 0
    %v212 = vsel %vm204, %v198, 0
    %v215 = vsel %vm204, %v199, 0
    %v218 = vsel %vm204, %v200, 0
    %v221 = vsel %vm204, %v201, 0
    %v224 = vsel %vm204, %v202, 0
    %v227 = vsel %vm204, %v203, 0
    %229 = vmatprep.subr.bf16.mxu0 0
    %230 = vmatpush1.bf16.msra.mxu0 %v66
    %231 = vmatprep.subr.bf16.mxu0 0
    %232 = vmatpush1.bf16.msra.mxu0 %v67
    %233 = vmatprep.subr.bf16.mxu0 0
    %234 = vmatpush1.bf16.msra.mxu0 0
    %235 = vmatprep.subr.bf16.mxu0 0
    %236 = vmatpush1.bf16.msra.mxu0 0
    %237 = vmatprep.subr.bf16.mxu0 0
    %238 = vmatpush1.bf16.msra.mxu0 0
    %239 = vmatprep.subr.bf16.mxu0 0
    %240 = vmatpush1.bf16.msra.mxu0 0
    %241 = vmatprep.subr.bf16.mxu0 0
    %242 = vmatpush1.bf16.msra.mxu0 0
    %243 = vmatprep.subr.bf16.mxu0 0
    %244 = vmatpush1.bf16.msra.mxu0 0
    %245 = vmatprep.subr.bf16.mxu0 0
    %246 = vmatpush1.bf16.msra.mxu0 0
    %247 = vmatprep.subr.bf16.mxu0 0
    %248 = vmatpush1.bf16.msra.mxu0 0
    %249 = vmatprep.subr.bf16.mxu0 0
    %250 = vmatpush1.bf16.msra.mxu0 0
    %251 = vmatprep.subr.bf16.mxu0 0
    %252 = vmatpush1.bf16.msra.mxu0 0
    %253 = vmatprep.subr.bf16.mxu0 0
    %254 = vmatpush1.bf16.msra.mxu0 0
    %255 = vmatprep.subr.bf16.mxu0 0
    %256 = vmatpush1.bf16.msra.mxu0 0
    %257 = vmatprep.subr.bf16.mxu0 0
    %258 = vmatpush1.bf16.msra.mxu0 0
    %259 = vmatprep.subr.bf16.mxu0 0
    %260 = vmatpush1.bf16.msra.mxu0 0
    %261 = vmatprep.mubr.bf16.mxu0 0
    %262 = vmatmul.mubr.bf16.gmra.mrb[0].mxu0 %v206
    %v263 = vpop.f32.mrb[0].mxu0
    %v264 = vadd.f32 %v87, %v263
    %v265 = vpop.f32.mrb[0].mxu0
    %v266 = vpop.f32.mrb[0].mxu0
    %v267 = vadd.f32 %v92, %v266
    %v268 = vpop.f32.mrb[0].mxu0
    %269 = vmatprep.mubr.bf16.mxu0 0
    %270 = vmatmul.mubr.bf16.gmra.mrb[0].mxu0 %v209
    %v271 = vpop.f32.mrb[0].mxu0
    %v272 = vadd.f32 %v97, %v271
    %v273 = vpop.f32.mrb[0].mxu0
    %v274 = vpop.f32.mrb[0].mxu0
    %v275 = vadd.f32 %v102, %v274
    %v276 = vpop.f32.mrb[0].mxu0
    %277 = vmatprep.mubr.bf16.mxu0 0
    %278 = vmatmul.mubr.bf16.gmra.mrb[0].mxu0 %v212
    %v279 = vpop.f32.mrb[0].mxu0
    %v280 = vadd.f32 %v107, %v279
    %v281 = vpop.f32.mrb[0].mxu0
    %v282 = vpop.f32.mrb[0].mxu0
    %v283 = vadd.f32 %v112, %v282
    %v284 = vpop.f32.mrb[0].mxu0
    %285 = vmatprep.mubr.bf16.mxu0 0
    %286 = vmatmul.mubr.bf16.gmra.mrb[0].mxu0 %v215
    %v287 = vpop.f32.mrb[0].mxu0
    %v288 = vadd.f32 %v117, %v287
    %v289 = vpop.f32.mrb[0].mxu0
    %v290 = vpop.f32.mrb[0].mxu0
    %v291 = vadd.f32 %v122, %v290
    %v292 = vpop.f32.mrb[0].mxu0
    %293 = vmatprep.mubr.bf16.mxu0 0
    %294 = vmatmul.mubr.bf16.gmra.mrb[0].mxu0 %v218
    %v295 = vpop.f32.mrb[0].mxu0
    %v296 = vadd.f32 %v127, %v295
    %v297 = vpop.f32.mrb[0].mxu0
    %v298 = vpop.f32.mrb[0].mxu0
    %v299 = vadd.f32 %v132, %v298
    %v300 = vpop.f32.mrb[0].mxu0
    %301 = vmatprep.mubr.bf16.mxu0 0
    %302 = vmatmul.mubr.bf16.gmra.mrb[0].mxu0 %v221
    %v303 = vpop.f32.mrb[0].mxu0
    %v304 = vadd.f32 %v137, %v303
    %v305 = vpop.f32.mrb[0].mxu0
    %v306 = vpop.f32.mrb[0].mxu0
    %v307 = vadd.f32 %v142, %v306
    %v308 = vpop.f32.mrb[0].mxu0
    %309 = vmatprep.mubr.bf16.mxu0 0
    %310 = vmatmul.mubr.bf16.gmra.mrb[0].mxu0 %v224
    %v311 = vpop.f32.mrb[0].mxu0
    %v312 = vadd.f32 %v147, %v311
    %v313 = vpop.f32.mrb[0].mxu0
    %v314 = vpop.f32.mrb[0].mxu0
    %v315 = vadd.f32 %v152, %v314
    %v316 = vpop.f32.mrb[0].mxu0
    %317 = vmatprep.mubr.bf16.mxu0 0
    %318 = vmatmul.mubr.bf16.gmra.mrb[0].mxu0 %v227
    %v319 = vpop.f32.mrb[0].mxu0
    %v320 = vadd.f32 %v157, %v319
    %v321 = vpop.f32.mrb[0].mxu0
    %v322 = vpop.f32.mrb[0].mxu0
    %v323 = vadd.f32 %v162, %v322
    %v324 = vpop.f32.mrb[0].mxu0
    %325 = vdwg.mxu0
    %v326 = vmax.f32 %v264, 0.0
    %v327 = vmax.f32 %v267, 0.0
    %v328 = vmax.f32 %v272, 0.0
    %v329 = vmax.f32 %v275, 0.0
    %v330 = vmax.f32 %v280, 0.0
    %v331 = vmax.f32 %v283, 0.0
    %v332 = vmax.f32 %v288, 0.0
    %v333 = vmax.f32 %v291, 0.0
    %v334 = vmax.f32 %v296, 0.0
    %v335 = vmax.f32 %v299, 0.0
    %v336 = vmax.f32 %v304, 0.0
    %v337 = vmax.f32 %v307, 0.0
    %v338 = vmax.f32 %v312, 0.0
    %v339 = vmax.f32 %v315, 0.0
    %v340 = vmax.f32 %v320, 0.0
    %v341 = vmax.f32 %v323, 0.0
    %v342 = vld [vmem:[%s4] sm:$0xf]
    %v343 = vld [vmem:[%s4 + $0x4] sm:$0xf]
    %v344 = vld [vmem:[%s4 + $0x8] sm:$0xf]
    %v345 = vld [vmem:[%s4 + $0xc] sm:$0xf]
    %v346 = vld [vmem:[%s4 + $0x10] sm:$0xf]
    %v347 = vld [vmem:[%s4 + $0x14] sm:$0xf]
    %v348 = vld [vmem:[%s4 + $0x18] sm:$0xf]
    %v349 = vld [vmem:[%s4 + $0x1c] sm:$0xf]
    %v350 = vld [vmem:[%s4 + $0x20] sm:$0xf]
    %v351 = vld [vmem:[%s4 + $0x24] sm:$0xf]
    %v352 = vld [vmem:[%s4 + $0x28] sm:$0xf]
    %v353 = vld [vmem:[%s4 + $0x2c] sm:$0xf]
    %v354 = vld [vmem:[%s4 + $0x30] sm:$0xf]
    %v355 = vld [vmem:[%s4 + $0x34] sm:$0xf]
    %v356 = vld [vmem:[%s4 + $0x38] sm:$0xf]
    %v357 = vld [vmem:[%s4 + $0x3c] sm:$0xf]
    %v358 = vpack.c.bf16 %v327, %v326
    %v359 = vpack.c.bf16 %v329, %v328
    %v360 = vpack.c.bf16 %v331, %v330
    %v361 = vpack.c.bf16 %v333, %v332
    %v362 = vpack.c.bf16 %v335, %v334
    %v363 = vpack.c.bf16 %v337, %v336
    %v364 = vpack.c.bf16 %v339, %v338
    %v365 = vpack.c.bf16 %v341, %v340
    %v366 = vld [vmem:[%s5] sm:$0xff]
    %v367 = vld [vmem:[%s5 + $0x8] sm:$0xff]
    %v368 = vld [vmem:[%s5 + $0x10] sm:$0xff]
    %v369 = vld [vmem:[%s5 + $0x18] sm:$0xff]
    %v370 = vld [vmem:[%s5 + $0x20] sm:$0xff]
    %v371 = vld [vmem:[%s5 + $0x28] sm:$0xff]
    %v372 = vld [vmem:[%s5 + $0x30] sm:$0xff]
    %v373 = vld [vmem:[%s5 + $0x38] sm:$0xff]
    %v374 = vld [vmem:[%s5 + $0x40] sm:$0xff]
    %v375 = vld [vmem:[%s5 + $0x48] sm:$0xff]
    %v376 = vld [vmem:[%s5 + $0x50] sm:$0xff]
    %v377 = vld [vmem:[%s5 + $0x58] sm:$0xff]
    %v378 = vld [vmem:[%s5 + $0x60] sm:$0xff]
    %v379 = vld [vmem:[%s5 + $0x68] sm:$0xff]
    %v380 = vld [vmem:[%s5 + $0x70] sm:$0xff]
    %v381 = vld [vmem:[%s5 + $0x78] sm:$0xff]
    %383 = vset.pattern.permute.xlu0 0
    %384 = vperm.xlu0 %383, %v366
    %v385 = vpop.permute.xlu0 %384
    %388 = vset.pattern.permute.xlu0 0
    %389 = vperm.xlu0 %388, %v367
    %v390 = vpop.permute.xlu0 %389
    %393 = vset.pattern.permute.xlu0 0
    %394 = vperm.xlu0 %393, %v368
    %v395 = vpop.permute.xlu0 %394
    %398 = vset.pattern.permute.xlu0 0
    %399 = vperm.xlu0 %398, %v369
    %v400 = vpop.permute.xlu0 %399
    %403 = vset.pattern.permute.xlu0 0
    %404 = vperm.xlu0 %403, %v370
    %v405 = vpop.permute.xlu0 %404
    %408 = vset.pattern.permute.xlu0 0
    %409 = vperm.xlu0 %408, %v371
    %v410 = vpop.permute.xlu0 %409
    %413 = vset.pattern.permute.xlu0 0
    %414 = vperm.xlu0 %413, %v372
    %v415 = vpop.permute.xlu0 %414
    %418 = vset.pattern.permute.xlu0 0
    %419 = vperm.xlu0 %418, %v373
    %v420 = vpop.permute.xlu0 %419
    %423 = vset.pattern.permute.xlu0 0
    %424 = vperm.xlu0 %423, %v374
    %v425 = vpop.permute.xlu0 %424
    %428 = vset.pattern.permute.xlu0 0
    %429 = vperm.xlu0 %428, %v375
    %v430 = vpop.permute.xlu0 %429
    %433 = vset.pattern.permute.xlu0 0
    %434 = vperm.xlu0 %433, %v376
    %v435 = vpop.permute.xlu0 %434
    %438 = vset.pattern.permute.xlu0 0
    %439 = vperm.xlu0 %438, %v377
    %v440 = vpop.permute.xlu0 %439
    %443 = vset.pattern.permute.xlu0 0
    %444 = vperm.xlu0 %443, %v378
    %v445 = vpop.permute.xlu0 %444
    %448 = vset.pattern.permute.xlu0 0
    %449 = vperm.xlu0 %448, %v379
    %v450 = vpop.permute.xlu0 %449
    %453 = vset.pattern.permute.xlu0 0
    %454 = vperm.xlu0 %453, %v380
    %v455 = vpop.permute.xlu0 %454
    %458 = vset.pattern.permute.xlu0 0
    %459 = vperm.xlu0 %458, %v381
    %v460 = vpop.permute.xlu0 %459
    %v478 = vunpack.c.l.b16 %v342
    %v479 = vunpack.c.l.b16 %v343
    %v480 = vunpack.c.l.b16 %v344
    %v481 = vunpack.c.l.b16 %v345
    %v482 = vunpack.c.l.b16 %v346
    %v483 = vunpack.c.l.b16 %v347
    %v484 = vunpack.c.l.b16 %v348
    %v485 = vunpack.c.l.b16 %v349
    %v486 = vunpack.c.l.b16 %v350
    %v487 = vunpack.c.l.b16 %v351
    %v488 = vunpack.c.l.b16 %v352
    %v489 = vunpack.c.l.b16 %v353
    %v490 = vunpack.c.l.b16 %v354
    %v491 = vunpack.c.l.b16 %v355
    %v492 = vunpack.c.l.b16 %v356
    %v493 = vunpack.c.l.b16 %v357
    %v494 = vpack.c.b16 %v479, %v478
    %v495 = vpack.c.b16 %v481, %v480
    %v496 = vpack.c.b16 %v483, %v482
    %v497 = vpack.c.b16 %v485, %v484
    %v498 = vpack.c.b16 %v487, %v486
    %v499 = vpack.c.b16 %v489, %v488
    %v500 = vpack.c.b16 %v491, %v490
    %v501 = vpack.c.b16 %v493, %v492
    %510 = vmatprep.subr.bf16.mxu0 0
    %511 = vmatpush1.bf16.msra.mxu0 %v358
    %512 = vmatprep.subr.bf16.mxu0 0
    %513 = vmatpush1.bf16.msra.mxu0 %v359
    %514 = vmatprep.subr.bf16.mxu0 0
    %515 = vmatpush1.bf16.msra.mxu0 %v360
    %516 = vmatprep.subr.bf16.mxu0 0
    %517 = vmatpush1.bf16.msra.mxu0 %v361
    %518 = vmatprep.subr.bf16.mxu0 0
    %519 = vmatpush1.bf16.msra.mxu0 %v362
    %520 = vmatprep.subr.bf16.mxu0 0
    %521 = vmatpush1.bf16.msra.mxu0 %v363
    %522 = vmatprep.subr.bf16.mxu0 0
    %523 = vmatpush1.bf16.msra.mxu0 %v364
    %524 = vmatprep.subr.bf16.mxu0 0
    %525 = vmatpush1.bf16.msra.mxu0 %v365
    %526 = vmatprep.subr.bf16.mxu0 0
    %527 = vmatpush1.bf16.msra.mxu0 0
    %528 = vmatprep.subr.bf16.mxu0 0
    %529 = vmatpush1.bf16.msra.mxu0 0
    %530 = vmatprep.subr.bf16.mxu0 0
    %531 = vmatpush1.bf16.msra.mxu0 0
    %532 = vmatprep.subr.bf16.mxu0 0
    %533 = vmatpush1.bf16.msra.mxu0 0
    %534 = vmatprep.subr.bf16.mxu0 0
    %535 = vmatpush1.bf16.msra.mxu0 0
    %536 = vmatprep.subr.bf16.mxu0 0
    %537 = vmatpush1.bf16.msra.mxu0 0
    %538 = vmatprep.subr.bf16.mxu0 0
    %539 = vmatpush1.bf16.msra.mxu0 0
    %540 = vmatprep.subr.bf16.mxu0 0
    %541 = vmatpush1.bf16.msra.mxu0 0
    %542 = vmatprep.mubr.bf16.mxu0 0
    %543 = vmatmul.mubr.bf16.gmra.mrb[0].mxu0 %v494
    %v544 = vpop.f32.mrb[0].mxu0
    %v545 = vadd.f32 %v385, %v544
    %v546 = vpop.f32.mrb[0].mxu0
    %v547 = vpop.f32.mrb[0].mxu0
    %v548 = vadd.f32 %v390, %v547
    %v549 = vpop.f32.mrb[0].mxu0
    %550 = vmatprep.mubr.bf16.mxu0 0
    %551 = vmatmul.mubr.bf16.gmra.mrb[0].mxu0 %v495
    %v552 = vpop.f32.mrb[0].mxu0
    %v553 = vadd.f32 %v395, %v552
    %v554 = vpop.f32.mrb[0].mxu0
    %v555 = vpop.f32.mrb[0].mxu0
    %v556 = vadd.f32 %v400, %v555
    %v557 = vpop.f32.mrb[0].mxu0
    %558 = vmatprep.mubr.bf16.mxu0 0
    %559 = vmatmul.mubr.bf16.gmra.mrb[0].mxu0 %v496
    %v560 = vpop.f32.mrb[0].mxu0
    %v561 = vadd.f32 %v405, %v560
    %v562 = vpop.f32.mrb[0].mxu0
    %v563 = vpop.f32.mrb[0].mxu0
    %v564 = vadd.f32 %v410, %v563
    %v565 = vpop.f32.mrb[0].mxu0
    %566 = vmatprep.mubr.bf16.mxu0 0
    %567 = vmatmul.mubr.bf16.gmra.mrb[0].mxu0 %v497
    %v568 = vpop.f32.mrb[0].mxu0
    %v569 = vadd.f32 %v415, %v568
    %v570 = vpop.f32.mrb[0].mxu0
    %v571 = vpop.f32.mrb[0].mxu0
    %v572 = vadd.f32 %v420, %v571
    %v573 = vpop.f32.mrb[0].mxu0
    %574 = vmatprep.mubr.bf16.mxu0 0
    %575 = vmatmul.mubr.bf16.gmra.mrb[0].mxu0 %v498
    %v576 = vpop.f32.mrb[0].mxu0
    %v577 = vadd.f32 %v425, %v576
    %v578 = vpop.f32.mrb[0].mxu0
    %v579 = vpop.f32.mrb[0].mxu0
    %v580 = vadd.f32 %v430, %v579
    %v581 = vpop.f32.mrb[0].mxu0
    %582 = vmatprep.mubr.bf16.mxu0 0
    %583 = vmatmul.mubr.bf16.gmra.mrb[0].mxu0 %v499
    %v584 = vpop.f32.mrb[0].mxu0
    %v585 = vadd.f32 %v435, %v584
    %v586 = vpop.f32.mrb[0].mxu0
    %v587 = vpop.f32.mrb[0].mxu0
    %v588 = vadd.f32 %v440, %v587
    %v589 = vpop.f32.mrb[0].mxu0
    %590 = vmatprep.mubr.bf16.mxu0 0
    %591 = vmatmul.mubr.bf16.gmra.mrb[0].mxu0 %v500
    %v592 = vpop.f32.mrb[0].mxu0
    %v593 = vadd.f32 %v445, %v592
    %v594 = vpop.f32.mrb[0].mxu0
    %v595 = vpop.f32.mrb[0].mxu0
    %v596 = vadd.f32 %v450, %v595
    %v597 = vpop.f32.mrb[0].mxu0
    %598 = vmatprep.mubr.bf16.mxu0 0
    %599 = vmatmul.mubr.bf16.gmra.mrb[0].mxu0 %v501
    %v600 = vpop.f32.mrb[0].mxu0
    %v601 = vadd.f32 %v455, %v600
    %v602 = vpop.f32.mrb[0].mxu0
    %v603 = vpop.f32.mrb[0].mxu0
    %v604 = vadd.f32 %v460, %v603
    %v605 = vpop.f32.mrb[0].mxu0
    %606 = vdwg.mxu0
    %v607 = vmax.f32 %v545, 0.0
    %v608 = vmax.f32 %v548, 0.0
    %v609 = vmax.f32 %v553, 0.0
    %v610 = vmax.f32 %v556, 0.0
    %v611 = vmax.f32 %v561, 0.0
    %v612 = vmax.f32 %v564, 0.0
    %v613 = vmax.f32 %v569, 0.0
    %v614 = vmax.f32 %v572, 0.0
    %v615 = vmax.f32 %v577, 0.0
    %v616 = vmax.f32 %v580, 0.0
    %v617 = vmax.f32 %v585, 0.0
    %v618 = vmax.f32 %v588, 0.0
    %v619 = vmax.f32 %v593, 0.0
    %v620 = vmax.f32 %v596, 0.0
    %v621 = vmax.f32 %v601, 0.0
    %v622 = vmax.f32 %v604, 0.0
    %s623 = scalar_lea.vmem %s4, 64
    %v624 = vld [vmem:[%s623] sm:$0xf]
    %v625 = vld [vmem:[%s623 + $0x4] sm:$0xf]
    %v626 = vld [vmem:[%s623 + $0x8] sm:$0xf]
    %v627 = vld [vmem:[%s623 + $0xc] sm:$0xf]
    %v628 = vld [vmem:[%s623 + $0x10] sm:$0xf]
    %v629 = vld [vmem:[%s623 + $0x14] sm:$0xf]
    %v630 = vld [vmem:[%s623 + $0x18] sm:$0xf]
    %v631 = vld [vmem:[%s623 + $0x1c] sm:$0xf]
    %v632 = vld [vmem:[%s623 + $0x20] sm:$0xf]
    %v633 = vld [vmem:[%s623 + $0x24] sm:$0xf]
    %v634 = vld [vmem:[%s623 + $0x28] sm:$0xf]
    %v635 = vld [vmem:[%s623 + $0x2c] sm:$0xf]
    %v636 = vld [vmem:[%s623 + $0x30] sm:$0xf]
    %v637 = vld [vmem:[%s623 + $0x34] sm:$0xf]
    %v638 = vld [vmem:[%s623 + $0x38] sm:$0xf]
    %v639 = vld [vmem:[%s623 + $0x3c] sm:$0xf]
    %v640 = vpack.c.bf16 %v608, %v607
    %v641 = vpack.c.bf16 %v610, %v609
    %v642 = vpack.c.bf16 %v612, %v611
    %v643 = vpack.c.bf16 %v614, %v613
    %v644 = vpack.c.bf16 %v616, %v615
    %v645 = vpack.c.bf16 %v618, %v617
    %v646 = vpack.c.bf16 %v620, %v619
    %v647 = vpack.c.bf16 %v622, %v621
    %s648 = scalar_lea.vmem %s5, 128
    %v649 = vld [vmem:[%s648] sm:$0xff]
    %v650 = vld [vmem:[%s648 + $0x8] sm:$0xff]
    %v651 = vld [vmem:[%s648 + $0x10] sm:$0xff]
    %v652 = vld [vmem:[%s648 + $0x18] sm:$0xff]
    %v653 = vld [vmem:[%s648 + $0x20] sm:$0xff]
    %v654 = vld [vmem:[%s648 + $0x28] sm:$0xff]
    %v655 = vld [vmem:[%s648 + $0x30] sm:$0xff]
    %v656 = vld [vmem:[%s648 + $0x38] sm:$0xff]
    %v657 = vld [vmem:[%s648 + $0x40] sm:$0xff]
    %v658 = vld [vmem:[%s648 + $0x48] sm:$0xff]
    %v659 = vld [vmem:[%s648 + $0x50] sm:$0xff]
    %v660 = vld [vmem:[%s648 + $0x58] sm:$0xff]
    %v661 = vld [vmem:[%s648 + $0x60] sm:$0xff]
    %v662 = vld [vmem:[%s648 + $0x68] sm:$0xff]
    %v663 = vld [vmem:[%s648 + $0x70] sm:$0xff]
    %v664 = vld [vmem:[%s648 + $0x78] sm:$0xff]
    %666 = vset.pattern.permute.xlu0 0
    %667 = vperm.xlu0 %666, %v649
    %v668 = vpop.permute.xlu0 %667
    %671 = vset.pattern.permute.xlu0 0
    %672 = vperm.xlu0 %671, %v650
    %v673 = vpop.permute.xlu0 %672
    %676 = vset.pattern.permute.xlu0 0
    %677 = vperm.xlu0 %676, %v651
    %v678 = vpop.permute.xlu0 %677
    %681 = vset.pattern.permute.xlu0 0
    %682 = vperm.xlu0 %681, %v652
    %v683 = vpop.permute.xlu0 %682
    %686 = vset.pattern.permute.xlu0 0
    %687 = vperm.xlu0 %686, %v653
    %v688 = vpop.permute.xlu0 %687
    %691 = vset.pattern.permute.xlu0 0
    %692 = vperm.xlu0 %691, %v654
    %v693 = vpop.permute.xlu0 %692
    %696 = vset.pattern.permute.xlu0 0
    %697 = vperm.xlu0 %696, %v655
    %v698 = vpop.permute.xlu0 %697
    %701 = vset.pattern.permute.xlu0 0
    %702 = vperm.xlu0 %701, %v656
    %v703 = vpop.permute.xlu0 %702
    %706 = vset.pattern.permute.xlu0 0
    %707 = vperm.xlu0 %706, %v657
    %v708 = vpop.permute.xlu0 %707
    %711 = vset.pattern.permute.xlu0 0
    %712 = vperm.xlu0 %711, %v658
    %v713 = vpop.permute.xlu0 %712
    %716 = vset.pattern.permute.xlu0 0
    %717 = vperm.xlu0 %716, %v659
    %v718 = vpop.permute.xlu0 %717
    %721 = vset.pattern.permute.xlu0 0
    %722 = vperm.xlu0 %721, %v660
    %v723 = vpop.permute.xlu0 %722
    %726 = vset.pattern.permute.xlu0 0
    %727 = vperm.xlu0 %726, %v661
    %v728 = vpop.permute.xlu0 %727
    %731 = vset.pattern.permute.xlu0 0
    %732 = vperm.xlu0 %731, %v662
    %v733 = vpop.permute.xlu0 %732
    %736 = vset.pattern.permute.xlu0 0
    %737 = vperm.xlu0 %736, %v663
    %v738 = vpop.permute.xlu0 %737
    %741 = vset.pattern.permute.xlu0 0
    %742 = vperm.xlu0 %741, %v664
    %v743 = vpop.permute.xlu0 %742
    %v761 = vunpack.c.l.b16 %v624
    %v762 = vunpack.c.l.b16 %v625
    %v763 = vunpack.c.l.b16 %v626
    %v764 = vunpack.c.l.b16 %v627
    %v765 = vunpack.c.l.b16 %v628
    %v766 = vunpack.c.l.b16 %v629
    %v767 = vunpack.c.l.b16 %v630
    %v768 = vunpack.c.l.b16 %v631
    %v769 = vunpack.c.l.b16 %v632
    %v770 = vunpack.c.l.b16 %v633
    %v771 = vunpack.c.l.b16 %v634
    %v772 = vunpack.c.l.b16 %v635
    %v773 = vunpack.c.l.b16 %v636
    %v774 = vunpack.c.l.b16 %v637
    %v775 = vunpack.c.l.b16 %v638
    %v776 = vunpack.c.l.b16 %v639
    %v777 = vpack.c.b16 %v762, %v761
    %v778 = vpack.c.b16 %v764, %v763
    %v779 = vpack.c.b16 %v766, %v765
    %v780 = vpack.c.b16 %v768, %v767
    %v781 = vpack.c.b16 %v770, %v769
    %v782 = vpack.c.b16 %v772, %v771
    %v783 = vpack.c.b16 %v774, %v773
    %v784 = vpack.c.b16 %v776, %v775
    %793 = vmatprep.subr.bf16.mxu0 0
    %794 = vmatpush1.bf16.msra.mxu0 %v640
    %795 = vmatprep.subr.bf16.mxu0 0
    %796 = vmatpush1.bf16.msra.mxu0 %v641
    %797 = vmatprep.subr.bf16.mxu0 0
    %798 = vmatpush1.bf16.msra.mxu0 %v642
    %799 = vmatprep.subr.bf16.mxu0 0
    %800 = vmatpush1.bf16.msra.mxu0 %v643
    %801 = vmatprep.subr.bf16.mxu0 0
    %802 = vmatpush1.bf16.msra.mxu0 %v644
    %803 = vmatprep.subr.bf16.mxu0 0
    %804 = vmatpush1.bf16.msra.mxu0 %v645
    %805 = vmatprep.subr.bf16.mxu0 0
    %806 = vmatpush1.bf16.msra.mxu0 %v646
    %807 = vmatprep.subr.bf16.mxu0 0
    %808 = vmatpush1.bf16.msra.mxu0 %v647
    %809 = vmatprep.subr.bf16.mxu0 0
    %810 = vmatpush1.bf16.msra.mxu0 0
    %811 = vmatprep.subr.bf16.mxu0 0
    %812 = vmatpush1.bf16.msra.mxu0 0
    %813 = vmatprep.subr.bf16.mxu0 0
    %814 = vmatpush1.bf16.msra.mxu0 0
    %815 = vmatprep.subr.bf16.mxu0 0
    %816 = vmatpush1.bf16.msra.mxu0 0
    %817 = vmatprep.subr.bf16.mxu0 0
    %818 = vmatpush1.bf16.msra.mxu0 0
    %819 = vmatprep.subr.bf16.mxu0 0
    %820 = vmatpush1.bf16.msra.mxu0 0
    %821 = vmatprep.subr.bf16.mxu0 0
    %822 = vmatpush1.bf16.msra.mxu0 0
    %823 = vmatprep.subr.bf16.mxu0 0
    %824 = vmatpush1.bf16.msra.mxu0 0
    %825 = vmatprep.mubr.bf16.mxu0 0
    %826 = vmatmul.mubr.bf16.gmra.mrb[0].mxu0 %v777
    %v827 = vpop.f32.mrb[0].mxu0
    %v828 = vadd.f32 %v668, %v827
    %v829 = vpop.f32.mrb[0].mxu0
    %v830 = vpop.f32.mrb[0].mxu0
    %v831 = vadd.f32 %v673, %v830
    %v832 = vpop.f32.mrb[0].mxu0
    %833 = vmatprep.mubr.bf16.mxu0 0
    %834 = vmatmul.mubr.bf16.gmra.mrb[0].mxu0 %v778
    %v835 = vpop.f32.mrb[0].mxu0
    %v836 = vadd.f32 %v678, %v835
    %v837 = vpop.f32.mrb[0].mxu0
    %v838 = vpop.f32.mrb[0].mxu0
    %v839 = vadd.f32 %v683, %v838
    %v840 = vpop.f32.mrb[0].mxu0
    %841 = vmatprep.mubr.bf16.mxu0 0
    %842 = vmatmul.mubr.bf16.gmra.mrb[0].mxu0 %v779
    %v843 = vpop.f32.mrb[0].mxu0
    %v844 = vadd.f32 %v688, %v843
    %v845 = vpop.f32.mrb[0].mxu0
    %v846 = vpop.f32.mrb[0].mxu0
    %v847 = vadd.f32 %v693, %v846
    %v848 = vpop.f32.mrb[0].mxu0
    %849 = vmatprep.mubr.bf16.mxu0 0
    %850 = vmatmul.mubr.bf16.gmra.mrb[0].mxu0 %v780
    %v851 = vpop.f32.mrb[0].mxu0
    %v852 = vadd.f32 %v698, %v851
    %v853 = vpop.f32.mrb[0].mxu0
    %v854 = vpop.f32.mrb[0].mxu0
    %v855 = vadd.f32 %v703, %v854
    %v856 = vpop.f32.mrb[0].mxu0
    %857 = vmatprep.mubr.bf16.mxu0 0
    %858 = vmatmul.mubr.bf16.gmra.mrb[0].mxu0 %v781
    %v859 = vpop.f32.mrb[0].mxu0
    %v860 = vadd.f32 %v708, %v859
    %v861 = vpop.f32.mrb[0].mxu0
    %v862 = vpop.f32.mrb[0].mxu0
    %v863 = vadd.f32 %v713, %v862
    %v864 = vpop.f32.mrb[0].mxu0
    %865 = vmatprep.mubr.bf16.mxu0 0
    %866 = vmatmul.mubr.bf16.gmra.mrb[0].mxu0 %v782
    %v867 = vpop.f32.mrb[0].mxu0
    %v868 = vadd.f32 %v718, %v867
    %v869 = vpop.f32.mrb[0].mxu0
    %v870 = vpop.f32.mrb[0].mxu0
    %v871 = vadd.f32 %v723, %v870
    %v872 = vpop.f32.mrb[0].mxu0
    %873 = vmatprep.mubr.bf16.mxu0 0
    %874 = vmatmul.mubr.bf16.gmra.mrb[0].mxu0 %v783
    %v875 = vpop.f32.mrb[0].mxu0
    %v876 = vadd.f32 %v728, %v875
    %v877 = vpop.f32.mrb[0].mxu0
    %v878 = vpop.f32.mrb[0].mxu0
    %v879 = vadd.f32 %v733, %v878
    %v880 = vpop.f32.mrb[0].mxu0
    %881 = vmatprep.mubr.bf16.mxu0 0
    %882 = vmatmul.mubr.bf16.gmra.mrb[0].mxu0 %v784
    %v883 = vpop.f32.mrb[0].mxu0
    %v884 = vadd.f32 %v738, %v883
    %v885 = vpop.f32.mrb[0].mxu0
    %v886 = vpop.f32.mrb[0].mxu0
    %v887 = vadd.f32 %v743, %v886
    %v888 = vpop.f32.mrb[0].mxu0
    %889 = vdwg.mxu0
    %v890 = vmax.f32 %v828, 0.0
    %v891 = vmax.f32 %v831, 0.0
    %v892 = vmax.f32 %v836, 0.0
    %v893 = vmax.f32 %v839, 0.0
    %v894 = vmax.f32 %v844, 0.0
    %v895 = vmax.f32 %v847, 0.0
    %v896 = vmax.f32 %v852, 0.0
    %v897 = vmax.f32 %v855, 0.0
    %v898 = vmax.f32 %v860, 0.0
    %v899 = vmax.f32 %v863, 0.0
    %v900 = vmax.f32 %v868, 0.0
    %v901 = vmax.f32 %v871, 0.0
    %v902 = vmax.f32 %v876, 0.0
    %v903 = vmax.f32 %v879, 0.0
    %v904 = vmax.f32 %v884, 0.0
    %v905 = vmax.f32 %v887, 0.0
    %s906 = scalar_lea.vmem %s4, 128
    %v907 = vld [vmem:[%s906] sm:$0xf]
    %v908 = vld [vmem:[%s906 + $0x4] sm:$0xf]
    %v909 = vld [vmem:[%s906 + $0x8] sm:$0xf]
    %v910 = vld [vmem:[%s906 + $0xc] sm:$0xf]
    %v911 = vld [vmem:[%s906 + $0x10] sm:$0xf]
    %v912 = vld [vmem:[%s906 + $0x14] sm:$0xf]
    %v913 = vld [vmem:[%s906 + $0x18] sm:$0xf]
    %v914 = vld [vmem:[%s906 + $0x1c] sm:$0xf]
    %v915 = vld [vmem:[%s906 + $0x20] sm:$0xf]
    %v916 = vld [vmem:[%s906 + $0x24] sm:$0xf]
    %v917 = vld [vmem:[%s906 + $0x28] sm:$0xf]
    %v918 = vld [vmem:[%s906 + $0x2c] sm:$0xf]
    %v919 = vld [vmem:[%s906 + $0x30] sm:$0xf]
    %v920 = vld [vmem:[%s906 + $0x34] sm:$0xf]
    %v921 = vld [vmem:[%s906 + $0x38] sm:$0xf]
    %v922 = vld [vmem:[%s906 + $0x3c] sm:$0xf]
    %v923 = vpack.c.bf16 %v891, %v890
    %v924 = vpack.c.bf16 %v893, %v892
    %v925 = vpack.c.bf16 %v895, %v894
    %v926 = vpack.c.bf16 %v897, %v896
    %v927 = vpack.c.bf16 %v899, %v898
    %v928 = vpack.c.bf16 %v901, %v900
    %v929 = vpack.c.bf16 %v903, %v902
    %v930 = vpack.c.bf16 %v905, %v904
    %s931 = scalar_lea.vmem %s5, 256
    %v932 = vld [vmem:[%s931] sm:$0xff]
    %v933 = vld [vmem:[%s931 + $0x8] sm:$0xff]
    %v934 = vld [vmem:[%s931 + $0x10] sm:$0xff]
    %v935 = vld [vmem:[%s931 + $0x18] sm:$0xff]
    %v936 = vld [vmem:[%s931 + $0x20] sm:$0xff]
    %v937 = vld [vmem:[%s931 + $0x28] sm:$0xff]
    %v938 = vld [vmem:[%s931 + $0x30] sm:$0xff]
    %v939 = vld [vmem:[%s931 + $0x38] sm:$0xff]
    %v940 = vld [vmem:[%s931 + $0x40] sm:$0xff]
    %v941 = vld [vmem:[%s931 + $0x48] sm:$0xff]
    %v942 = vld [vmem:[%s931 + $0x50] sm:$0xff]
    %v943 = vld [vmem:[%s931 + $0x58] sm:$0xff]
    %v944 = vld [vmem:[%s931 + $0x60] sm:$0xff]
    %v945 = vld [vmem:[%s931 + $0x68] sm:$0xff]
    %v946 = vld [vmem:[%s931 + $0x70] sm:$0xff]
    %v947 = vld [vmem:[%s931 + $0x78] sm:$0xff]
    %949 = vset.pattern.permute.xlu0 0
    %950 = vperm.xlu0 %949, %v932
    %v951 = vpop.permute.xlu0 %950
    %954 = vset.pattern.permute.xlu0 0
    %955 = vperm.xlu0 %954, %v933
    %v956 = vpop.permute.xlu0 %955
    %959 = vset.pattern.permute.xlu0 0
    %960 = vperm.xlu0 %959, %v934
    %v961 = vpop.permute.xlu0 %960
    %964 = vset.pattern.permute.xlu0 0
    %965 = vperm.xlu0 %964, %v935
    %v966 = vpop.permute.xlu0 %965
    %969 = vset.pattern.permute.xlu0 0
    %970 = vperm.xlu0 %969, %v936
    %v971 = vpop.permute.xlu0 %970
    %974 = vset.pattern.permute.xlu0 0
    %975 = vperm.xlu0 %974, %v937
    %v976 = vpop.permute.xlu0 %975
    %979 = vset.pattern.permute.xlu0 0
    %980 = vperm.xlu0 %979, %v938
    %v981 = vpop.permute.xlu0 %980
    %984 = vset.pattern.permute.xlu0 0
    %985 = vperm.xlu0 %984, %v939
    %v986 = vpop.permute.xlu0 %985
    %989 = vset.pattern.permute.xlu0 0
    %990 = vperm.xlu0 %989, %v940
    %v991 = vpop.permute.xlu0 %990
    %994 = vset.pattern.permute.xlu0 0
    %995 = vperm.xlu0 %994, %v941
    %v996 = vpop.permute.xlu0 %995
    %999 = vset.pattern.permute.xlu0 0
    %1000 = vperm.xlu0 %999, %v942
    %v1001 = vpop.permute.xlu0 %1000
    %1004 = vset.pattern.permute.xlu0 0
    %1005 = vperm.xlu0 %1004, %v943
    %v1006 = vpop.permute.xlu0 %1005
    %1009 = vset.pattern.permute.xlu0 0
    %1010 = vperm.xlu0 %1009, %v944
    %v1011 = vpop.permute.xlu0 %1010
    %1014 = vset.pattern.permute.xlu0 0
    %1015 = vperm.xlu0 %1014, %v945
    %v1016 = vpop.permute.xlu0 %1015
    %1019 = vset.pattern.permute.xlu0 0
    %1020 = vperm.xlu0 %1019, %v946
    %v1021 = vpop.permute.xlu0 %1020
    %1024 = vset.pattern.permute.xlu0 0
    %1025 = vperm.xlu0 %1024, %v947
    %v1026 = vpop.permute.xlu0 %1025
    %v1044 = vunpack.c.l.b16 %v907
    %v1045 = vunpack.c.l.b16 %v908
    %v1046 = vunpack.c.l.b16 %v909
    %v1047 = vunpack.c.l.b16 %v910
    %v1048 = vunpack.c.l.b16 %v911
    %v1049 = vunpack.c.l.b16 %v912
    %v1050 = vunpack.c.l.b16 %v913
    %v1051 = vunpack.c.l.b16 %v914
    %v1052 = vunpack.c.l.b16 %v915
    %v1053 = vunpack.c.l.b16 %v916
    %v1054 = vunpack.c.l.b16 %v917
    %v1055 = vunpack.c.l.b16 %v918
    %v1056 = vunpack.c.l.b16 %v919
    %v1057 = vunpack.c.l.b16 %v920
    %v1058 = vunpack.c.l.b16 %v921
    %v1059 = vunpack.c.l.b16 %v922
    %v1060 = vpack.c.b16 %v1045, %v1044
    %v1061 = vpack.c.b16 %v1047, %v1046
    %v1062 = vpack.c.b16 %v1049, %v1048
    %v1063 = vpack.c.b16 %v1051, %v1050
    %v1064 = vpack.c.b16 %v1053, %v1052
    %v1065 = vpack.c.b16 %v1055, %v1054
    %v1066 = vpack.c.b16 %v1057, %v1056
    %v1067 = vpack.c.b16 %v1059, %v1058
    %1076 = vmatprep.subr.bf16.mxu0 0
    %1077 = vmatpush1.bf16.msra.mxu0 %v923
    %1078 = vmatprep.subr.bf16.mxu0 0
    %1079 = vmatpush1.bf16.msra.mxu0 %v924
    %1080 = vmatprep.subr.bf16.mxu0 0
    %1081 = vmatpush1.bf16.msra.mxu0 %v925
    %1082 = vmatprep.subr.bf16.mxu0 0
    %1083 = vmatpush1.bf16.msra.mxu0 %v926
    %1084 = vmatprep.subr.bf16.mxu0 0
    %1085 = vmatpush1.bf16.msra.mxu0 %v927
    %1086 = vmatprep.subr.bf16.mxu0 0
    %1087 = vmatpush1.bf16.msra.mxu0 %v928
    %1088 = vmatprep.subr.bf16.mxu0 0
    %1089 = vmatpush1.bf16.msra.mxu0 %v929
    %1090 = vmatprep.subr.bf16.mxu0 0
    %1091 = vmatpush1.bf16.msra.mxu0 %v930
    %1092 = vmatprep.subr.bf16.mxu0 0
    %1093 = vmatpush1.bf16.msra.mxu0 0
    %1094 = vmatprep.subr.bf16.mxu0 0
    %1095 = vmatpush1.bf16.msra.mxu0 0
    %1096 = vmatprep.subr.bf16.mxu0 0
    %1097 = vmatpush1.bf16.msra.mxu0 0
    %1098 = vmatprep.subr.bf16.mxu0 0
    %1099 = vmatpush1.bf16.msra.mxu0 0
    %1100 = vmatprep.subr.bf16.mxu0 0
    %1101 = vmatpush1.bf16.msra.mxu0 0
    %1102 = vmatprep.subr.bf16.mxu0 0
    %1103 = vmatpush1.bf16.msra.mxu0 0
    %1104 = vmatprep.subr.bf16.mxu0 0
    %1105 = vmatpush1.bf16.msra.mxu0 0
    %1106 = vmatprep.subr.bf16.mxu0 0
    %1107 = vmatpush1.bf16.msra.mxu0 0
    %1108 = vmatprep.mubr.bf16.mxu0 0
    %1109 = vmatmul.mubr.bf16.gmra.mrb[0].mxu0 %v1060
    %v1110 = vpop.f32.mrb[0].mxu0
    %v1111 = vadd.f32 %v951, %v1110
    %v1112 = vpop.f32.mrb[0].mxu0
    %v1113 = vpop.f32.mrb[0].mxu0
    %v1114 = vadd.f32 %v956, %v1113
    %v1115 = vpop.f32.mrb[0].mxu0
    %1116 = vmatprep.mubr.bf16.mxu0 0
    %1117 = vmatmul.mubr.bf16.gmra.mrb[0].mxu0 %v1061
    %v1118 = vpop.f32.mrb[0].mxu0
    %v1119 = vadd.f32 %v961, %v1118
    %v1120 = vpop.f32.mrb[0].mxu0
    %v1121 = vpop.f32.mrb[0].mxu0
    %v1122 = vadd.f32 %v966, %v1121
    %v1123 = vpop.f32.mrb[0].mxu0
    %1124 = vmatprep.mubr.bf16.mxu0 0
    %1125 = vmatmul.mubr.bf16.gmra.mrb[0].mxu0 %v1062
    %v1126 = vpop.f32.mrb[0].mxu0
    %v1127 = vadd.f32 %v971, %v1126
    %v1128 = vpop.f32.mrb[0].mxu0
    %v1129 = vpop.f32.mrb[0].mxu0
    %v1130 = vadd.f32 %v976, %v1129
    %v1131 = vpop.f32.mrb[0].mxu0
    %1132 = vmatprep.mubr.bf16.mxu0 0
    %1133 = vmatmul.mubr.bf16.gmra.mrb[0].mxu0 %v1063
    %v1134 = vpop.f32.mrb[0].mxu0
    %v1135 = vadd.f32 %v981, %v1134
    %v1136 = vpop.f32.mrb[0].mxu0
    %v1137 = vpop.f32.mrb[0].mxu0
    %v1138 = vadd.f32 %v986, %v1137
    %v1139 = vpop.f32.mrb[0].mxu0
    %1140 = vmatprep.mubr.bf16.mxu0 0
    %1141 = vmatmul.mubr.bf16.gmra.mrb[0].mxu0 %v1064
    %v1142 = vpop.f32.mrb[0].mxu0
    %v1143 = vadd.f32 %v991, %v1142
    %v1144 = vpop.f32.mrb[0].mxu0
    %v1145 = vpop.f32.mrb[0].mxu0
    %v1146 = vadd.f32 %v996, %v1145
    %v1147 = vpop.f32.mrb[0].mxu0
    %1148 = vmatprep.mubr.bf16.mxu0 0
    %1149 = vmatmul.mubr.bf16.gmra.mrb[0].mxu0 %v1065
    %v1150 = vpop.f32.mrb[0].mxu0
    %v1151 = vadd.f32 %v1001, %v1150
    %v1152 = vpop.f32.mrb[0].mxu0
    %v1153 = vpop.f32.mrb[0].mxu0
    %v1154 = vadd.f32 %v1006, %v1153
    %v1155 = vpop.f32.mrb[0].mxu0
    %1156 = vmatprep.mubr.bf16.mxu0 0
    %1157 = vmatmul.mubr.bf16.gmra.mrb[0].mxu0 %v1066
    %v1158 = vpop.f32.mrb[0].mxu0
    %v1159 = vadd.f32 %v1011, %v1158
    %v1160 = vpop.f32.mrb[0].mxu0
    %v1161 = vpop.f32.mrb[0].mxu0
    %v1162 = vadd.f32 %v1016, %v1161
    %v1163 = vpop.f32.mrb[0].mxu0
    %1164 = vmatprep.mubr.bf16.mxu0 0
    %1165 = vmatmul.mubr.bf16.gmra.mrb[0].mxu0 %v1067
    %v1166 = vpop.f32.mrb[0].mxu0
    %v1167 = vadd.f32 %v1021, %v1166
    %v1168 = vpop.f32.mrb[0].mxu0
    %v1169 = vpop.f32.mrb[0].mxu0
    %v1170 = vadd.f32 %v1026, %v1169
    %v1171 = vpop.f32.mrb[0].mxu0
    %1172 = vdwg.mxu0
    %v1173 = vmax.f32 %v1111, 0.0
    %v1174 = vmax.f32 %v1114, 0.0
    %v1175 = vmax.f32 %v1119, 0.0
    %v1176 = vmax.f32 %v1122, 0.0
    %v1177 = vmax.f32 %v1127, 0.0
    %v1178 = vmax.f32 %v1130, 0.0
    %v1179 = vmax.f32 %v1135, 0.0
    %v1180 = vmax.f32 %v1138, 0.0
    %v1181 = vmax.f32 %v1143, 0.0
    %v1182 = vmax.f32 %v1146, 0.0
    %v1183 = vmax.f32 %v1151, 0.0
    %v1184 = vmax.f32 %v1154, 0.0
    %v1185 = vmax.f32 %v1159, 0.0
    %v1186 = vmax.f32 %v1162, 0.0
    %v1187 = vmax.f32 %v1167, 0.0
    %v1188 = vmax.f32 %v1170, 0.0
    %v1189 = vld [vmem:[%s6] sm:$0xff]
    %v1190 = vld [vmem:[%s6 + $0x8] sm:$0xff]
    %v1191 = vld [vmem:[%s6 + $0x10] sm:$0xff]
    %v1192 = vld [vmem:[%s6 + $0x18] sm:$0xff]
    %v1193 = vld [vmem:[%s6 + $0x20] sm:$0xff]
    %v1194 = vld [vmem:[%s6 + $0x28] sm:$0xff]
    %v1195 = vld [vmem:[%s6 + $0x30] sm:$0xff]
    %v1196 = vld [vmem:[%s6 + $0x38] sm:$0xff]
    %v1197 = vld [vmem:[%s6 + $0x40] sm:$0xff]
    %v1198 = vld [vmem:[%s6 + $0x48] sm:$0xff]
    %v1199 = vld [vmem:[%s6 + $0x50] sm:$0xff]
    %v1200 = vld [vmem:[%s6 + $0x58] sm:$0xff]
    %v1201 = vld [vmem:[%s6 + $0x60] sm:$0xff]
    %v1202 = vld [vmem:[%s6 + $0x68] sm:$0xff]
    %v1203 = vld [vmem:[%s6 + $0x70] sm:$0xff]
    %v1204 = vld [vmem:[%s6 + $0x78] sm:$0xff]
    %1206 = vset.pattern.permute.xlu0 0
    %1207 = vperm.xlu0 %1206, %v1189
    %v1208 = vpop.permute.xlu0 %1207
    %1211 = vset.pattern.permute.xlu0 0
    %1212 = vperm.xlu0 %1211, %v1190
    %v1213 = vpop.permute.xlu0 %1212
    %1216 = vset.pattern.permute.xlu0 0
    %1217 = vperm.xlu0 %1216, %v1191
    %v1218 = vpop.permute.xlu0 %1217
    %1221 = vset.pattern.permute.xlu0 0
    %1222 = vperm.xlu0 %1221, %v1192
    %v1223 = vpop.permute.xlu0 %1222
    %1226 = vset.pattern.permute.xlu0 0
    %1227 = vperm.xlu0 %1226, %v1193
    %v1228 = vpop.permute.xlu0 %1227
    %1231 = vset.pattern.permute.xlu0 0
    %1232 = vperm.xlu0 %1231, %v1194
    %v1233 = vpop.permute.xlu0 %1232
    %1236 = vset.pattern.permute.xlu0 0
    %1237 = vperm.xlu0 %1236, %v1195
    %v1238 = vpop.permute.xlu0 %1237
    %1241 = vset.pattern.permute.xlu0 0
    %1242 = vperm.xlu0 %1241, %v1196
    %v1243 = vpop.permute.xlu0 %1242
    %1246 = vset.pattern.permute.xlu0 0
    %1247 = vperm.xlu0 %1246, %v1197
    %v1248 = vpop.permute.xlu0 %1247
    %1251 = vset.pattern.permute.xlu0 0
    %1252 = vperm.xlu0 %1251, %v1198
    %v1253 = vpop.permute.xlu0 %1252
    %1256 = vset.pattern.permute.xlu0 0
    %1257 = vperm.xlu0 %1256, %v1199
    %v1258 = vpop.permute.xlu0 %1257
    %1261 = vset.pattern.permute.xlu0 0
    %1262 = vperm.xlu0 %1261, %v1200
    %v1263 = vpop.permute.xlu0 %1262
    %1266 = vset.pattern.permute.xlu0 0
    %1267 = vperm.xlu0 %1266, %v1201
    %v1268 = vpop.permute.xlu0 %1267
    %1271 = vset.pattern.permute.xlu0 0
    %1272 = vperm.xlu0 %1271, %v1202
    %v1273 = vpop.permute.xlu0 %1272
    %1276 = vset.pattern.permute.xlu0 0
    %1277 = vperm.xlu0 %1276, %v1203
    %v1278 = vpop.permute.xlu0 %1277
    %1281 = vset.pattern.permute.xlu0 0
    %1282 = vperm.xlu0 %1281, %v1204
    %v1283 = vpop.permute.xlu0 %1282
    %v1285 = vmul.f32 %v1173, %v1208
    %v1286 = vmul.f32 %v1174, %v1213
    %v1287 = vmul.f32 %v1175, %v1218
    %v1288 = vmul.f32 %v1176, %v1223
    %v1289 = vmul.f32 %v1177, %v1228
    %v1290 = vmul.f32 %v1178, %v1233
    %v1291 = vmul.f32 %v1179, %v1238
    %v1292 = vmul.f32 %v1180, %v1243
    %v1293 = vmul.f32 %v1181, %v1248
    %v1294 = vmul.f32 %v1182, %v1253
    %v1295 = vmul.f32 %v1183, %v1258
    %v1296 = vmul.f32 %v1184, %v1263
    %v1297 = vmul.f32 %v1185, %v1268
    %v1298 = vmul.f32 %v1186, %v1273
    %v1299 = vmul.f32 %v1187, %v1278
    %v1300 = vmul.f32 %v1188, %v1283
    %v1301 = vadd.f32 %v1285, %v1293
    %v1302 = vadd.f32 %v1286, %v1294
    %v1303 = vadd.f32 %v1287, %v1295
    %v1304 = vadd.f32 %v1288, %v1296
    %v1305 = vadd.f32 %v1289, %v1297
    %v1306 = vadd.f32 %v1290, %v1298
    %v1307 = vadd.f32 %v1291, %v1299
    %v1308 = vadd.f32 %v1292, %v1300
    %v1309 = vadd.f32 %v1301, %v1305
    %v1310 = vadd.f32 %v1302, %v1306
    %v1311 = vadd.f32 %v1303, %v1307
    %v1312 = vadd.f32 %v1304, %v1308
    %v1313 = vadd.f32 %v1309, %v1311
    %v1314 = vadd.f32 %v1310, %v1312
    %v1315 = vadd.f32 %v1313, %v1314
    %v1316 = vrot.slane %v1315, 4
    %v1317 = vadd.f32 %v1315, %v1316
    %v1318 = vrot.slane %v1317, 2
    %v1319 = vadd.f32 %v1317, %v1318
    %v1320 = vrot.slane %v1319, 1
    %v1321 = vadd.f32 %v1319, %v1320
    %s1322 = sld [smem:[#allocation3]]
    %v1323 = vstv %s1322
    %v1324 = vadd.f32 %v1321, %v1323
    %1325 = vst [vmem:[#allocation4] sm:$0x1] %v1324
    // Predicated region
    $region34: #{tpu_custom_call.1} parent=1 // pred_check
      _
    $region35: #{tpu_custom_call.1} parent=1 // pred_check_branch
      %1327 = sbr.rel (0) target = $region37
    $region36: #{tpu_custom_call.1} parent=1 // pred_region
      %s1329 = ssub.s32 16, 16
      %1330 = vsyncadd [#allocation5], %s1329
      %s1332 = sshll.u32 [#allocation4], 4
      %s1333 = int_to_ptr.vmem [resolvable:$true] %s1332
      %1335 = dma.vmem_to_hbm [thread:$0]  %s1333, 16, %s8, [#allocation5]
    $region37: #{tpu_custom_call.1} parent=1 // pred_fallthru
      _
    // Predicated region
    $region38: #{tpu_custom_call.1} parent=1 // pred_check
      _
    $region39: #{tpu_custom_call.1} parent=1 // pred_check_branch
      %1337 = sbr.rel (0) target = $region41
    $region40: #{tpu_custom_call.1} parent=1 // pred_region
      %1338 = dma.done [#allocation5], 16
    $region41: #{tpu_custom_call.1} parent=1 // pred_fallthru
      _
    %1339 = vsyncpa [#allocation5], 1

</llo_original>
